<compile_context>
chip_gen: v7x
topology: tpu7x:2x2x1
jax: 0.10.0
libtpu: 0.0.40
codegen_flags: <defaults>
</compile_context>

<pallas_src>
import functools

import jax
import jax.numpy as jnp
from jax import lax
from jax.experimental import pallas as pl
from jax.experimental.pallas import tpu as pltpu

LANE = 128  # TPU lane width; feature axis is padded to a multiple of this.


def _round_up(n, m):
    return (n + m - 1) // m * m


# ----------------------------------------------------------------------------
# Fused Pallas kernel: the whole residual block in one pallas_call.
# grid = (L,), one step per graph-conv layer ("arbitrary": layer l consumes
# layer l-1's output, carried in a bf16 VMEM scratch).
#
# Per layer:
#   [h0 | h1] = X @ [W0 | W1]                 (one 2*Fp-wide MXU pass)
#   y   = h0 + A @ (h1 + b1)                  (b0 omitted: BN mean cancels it)
#   yn  = y * scale + shift                   (folded BatchNorm1d, batch stats)
#   out = relu(yn [+ res  on the last layer])
# ----------------------------------------------------------------------------
def _resblock_kernel(x0_ref, adj_ref, w01_ref, bn_ref, *rest,
                     eps, add_residual, has_res_input, fp):
    if has_res_input:
        res_ref, o_ref, h_ref = rest
    else:
        o_ref, h_ref = rest
        res_ref = x0_ref          # fin == out_features: residual is x0 itself

    layer = pl.program_id(0)
    last = pl.num_programs(0) - 1

    # Layer 0 reads the (bf16) input features directly; later layers read the
    # bf16 carry kept in VMEM scratch (no layer-0 scratch round trip).
    xb = lax.cond(layer == 0, lambda: x0_ref[...], lambda: h_ref[...])

    # Fused graph-conv feature matmul: [h0 | h1] = X @ [W0 | W1].
    h01 = jnp.dot(xb, w01_ref[0], preferred_element_type=jnp.float32)
    h0 = h01[:, :fp]
    h1 = h01[:, fp:]

    bn = bn_ref[0]                # (3, Fp) f32 rows: [b1; gamma; beta]
    b1 = bn[0:1, :]
    gamma = bn[1:2, :]
    beta = bn[2:3, :]

    agg = jnp.dot(adj_ref[...], (h1 + b1).astype(jnp.bfloat16),
                  preferred_element_type=jnp.float32)
    y = h0 + agg

    # BatchNorm1d training-mode forward (biased batch stats over vertices),
    # folded into per-channel scale/shift. Padded lanes are identically zero
    # and have gamma = beta = 0, so they stay exactly zero.
    mu = jnp.mean(y, axis=0, keepdims=True)
    d = y - mu
    var = jnp.mean(d * d, axis=0, keepdims=True)
    scale = gamma * lax.rsqrt(var + eps)
    shift = beta - mu * scale
    yn = y * scale + shift

    @pl.when(layer < last)
    def _():
        h_ref[...] = jnp.maximum(yn, 0.0).astype(h_ref.dtype)   # bf16 carry

    @pl.when(layer == last)
    def _():
        if add_residual:
            final = yn + res_ref[...].astype(jnp.float32)
        else:
            final = yn
        o_ref[...] = jnp.maximum(final, 0.0).astype(o_ref.dtype)


# ----------------------------------------------------------------------------
# Wrapper: pad/stack parameters, build specs, single pallas_call.
# ----------------------------------------------------------------------------
def _pad_2d(a, rows, cols):
    return jnp.zeros((rows, cols), a.dtype).at[:a.shape[0], :a.shape[1]].set(a)


def _pad_1d(a, cols):
    return jnp.zeros((cols,), a.dtype).at[:a.shape[0]].set(a)


def gconv_residual_block(features, adj, params, out_features, *, eps=1e-5):
    V, fin = features.shape
    Fp = _round_up(max(fin, out_features), LANE)    # lane-dense feature width

    layers = [params["first"]] + list(params["hidden"])
    L = len(layers)
    # PyTorch forward only adds the residual inside the hidden-layer loop.
    add_residual = len(params["hidden"]) > 0
    res_from_x0 = (fin == out_features)
    has_res_input = add_residual and not res_from_x0

    # Fused, padded, bf16 weight stacks: (L, Fp, 2*Fp) = [W0 | W1].
    w01s = jnp.stack([
        jnp.concatenate([_pad_2d(p["w0"], Fp, Fp), _pad_2d(p["w1"], Fp, Fp)],
                        axis=1)
        for p in layers]).astype(jnp.bfloat16)

    # Merged per-layer scalar params: (L, 3, Fp) f32 rows = [b1; gamma; beta].
    bns = jnp.stack([
        jnp.stack([_pad_1d(p["b1"], Fp),
                   _pad_1d(p["gamma"], Fp),
                   _pad_1d(p["beta"], Fp)])
        for p in layers]).astype(jnp.float32)

    # bf16 input features / MXU inputs (f32 accumulation everywhere).
    x0 = _pad_2d(features.astype(jnp.float32), V, Fp).astype(jnp.bfloat16)

    # A holds small integer edge counts -> exact in bf16 for multiplicity < 256.
    adj_b = adj.astype(jnp.bfloat16)

    def resident(shape):     # same block every layer -> DMA'd once, VMEM-resident
        nd = len(shape)
        return pl.BlockSpec(shape, lambda l, nd=nd: (0,) * nd)

    def streamed(shape):     # stacked (L, ...) per-layer params, one slab per step
        nd = len(shape)
        return pl.BlockSpec((1,) + tuple(shape[1:]),
                            lambda l, nd=nd: (l,) + (0,) * (nd - 1))

    in_arrays = [x0, adj_b, w01s, bns]
    in_specs = [
        resident((V, Fp)),              # x0 (padded bf16 features)
        resident((V, V)),               # adjacency (bf16)
        streamed((L, Fp, 2 * Fp)),      # [W0 | W1] stack (bf16)
        streamed((L, 3, Fp)),           # [b1; gamma; beta] stack (f32)
    ]
    if has_res_input:
        res = nearest_interp_features(features.astype(jnp.float32), out_features)
        in_arrays.append(_pad_2d(res, V, Fp))
        in_specs.append(resident((V, Fp)))   # residual, only read on last layer

    # Explicit scoped-VMEM limit: v5e defaults to 16 MiB; cap at 48 MiB so the
    # same value is safe on v7x (64 MiB physical VMEM).
    bytes_needed = (
        2 * V * Fp * 2 +            # x0 (default double-buffered)
        2 * V * V * 2 +             # adjacency
        2 * Fp * (2 * Fp) * 2 +     # one streamed W01 slab (bf16), x2 buffers
        2 * 3 * Fp * 4 +            # one streamed bn slab (f32), x2 buffers
        2 * V * Fp * 4 +            # output block (f32)
        V * Fp * 2)                 # bf16 layer carry scratch
    if has_res_input:
        bytes_needed += 2 * V * Fp * 4
    vmem_limit = int(min(max(2 * bytes_needed, 32 * 1024 * 1024),
                         48 * 1024 * 1024))

    kernel = functools.partial(_resblock_kernel, eps=eps,
                               add_residual=add_residual,
                               has_res_input=has_res_input, fp=Fp)

    out = pl.pallas_call(
        kernel,
        out_shape=jax.ShapeDtypeStruct((V, Fp), jnp.float32),
        grid=(L,),
        in_specs=in_specs,
        out_specs=resident((V, Fp)),    # lane-dense (Fp = 128 multiple) output
        scratch_shapes=[pltpu.VMEM((V, Fp), jnp.bfloat16)],  # bf16 layer carry
        compiler_params=pltpu.CompilerParams(
            dimension_semantics=("arbitrary",),              # layers sequential
            vmem_limit_bytes=vmem_limit),
    )(*in_arrays)

    return out[:, :out_features]


def features2features_residual(features, edge_index, params, out_features):
    V = features.shape[0]
    adj = build_adjacency(edge_index, V)
    return gconv_residual_block(features, adj, params, out_features)


# ----------------------------------------------------------------------------
# Glue: parameters, adjacency, residual interpolation
# ----------------------------------------------------------------------------
def init_params(key, in_features, out_features, hidden_layer_count):
    """Deterministic synthetic parameters (PyTorch-Linear-like uniform init)."""
    def linear(k, fin, fout):
        kw, kb = jax.random.split(k)
        bound = 1.0 / jnp.sqrt(fin)
        # stored pre-transposed as (fin, fout) so the kernel does x @ W
        w = jax.random.uniform(kw, (fin, fout), jnp.float32, -bound, bound)
        b = jax.random.uniform(kb, (fout,), jnp.float32, -bound, bound)
        return w, b

    params = {}
    keys = jax.random.split(key, 2 * (hidden_layer_count + 1))
    # b0 is kept in params (used by the reference) but dropped in the kernel:
    # BatchNorm's mean subtraction cancels it exactly.
    w0, b0 = linear(keys[0], in_features, out_features)
    w1, b1 = linear(keys[1], in_features, out_features)
    params["first"] = dict(w0=w0, b0=b0, w1=w1, b1=b1,
                           gamma=jnp.ones((out_features,), jnp.float32),
                           beta=jnp.zeros((out_features,), jnp.float32))
    hidden = []
    for i in range(hidden_layer_count):
        w0, b0 = linear(keys[2 + 2 * i], out_features, out_features)
        w1, b1 = linear(keys[3 + 2 * i], out_features, out_features)
        hidden.append(dict(w0=w0, b0=b0, w1=w1, b1=b1,
                           gamma=jnp.ones((out_features,), jnp.float32),
                           beta=jnp.zeros((out_features,), jnp.float32)))
    params["hidden"] = hidden
    return params


def build_adjacency(edge_index, num_verts):
    """Dense adjacency: A[i, j] = number of edges j -> i."""
    src, dst = edge_index[0], edge_index[1]
    a = jnp.zeros((num_verts, num_verts), jnp.float32)
    return a.at[dst, src].add(1.0)


def nearest_interp_features(x, out_features):
    """F.interpolate(x.unsqueeze(1), out_features, mode='nearest').squeeze(1)."""
    fin = x.shape[-1]
    idx = (jnp.arange(out_features) * fin // out_features).astype(jnp.int32)
    return x[:, idx]


# ----------------------------------------------------------------------------
# Pure-JAX reference. mxu_dtype=bf16 mirrors the kernel's MXU-input casts
# (structure check); mxu_dtype=f32 is the exact module semantics.
# ----------------------------------------------------------------------------
def _layer_ref(x, adj, p, res, add_res, eps=1e-5, mxu_dtype=jnp.float32):
    c = lambda a: a.astype(mxu_dtype)
    h0 = jnp.dot(c(x), c(p["w0"]), preferred_element_type=jnp.float32)
    h1 = jnp.dot(c(x), c(p["w1"]), preferred_element_type=jnp.float32) + p["b1"]
    agg = jnp.dot(c(adj), c(h1), preferred_element_type=jnp.float32)
    y = h0 + p["b0"] + agg          # kernel omits b0; BN cancels it exactly
    mu = y.mean(0, keepdims=True)
    var = ((y - mu) ** 2).mean(0, keepdims=True)
    yn = (y - mu) / jnp.sqrt(var + eps) * p["gamma"] + p["beta"]
    if add_res:
        yn = yn + res
    return jnp.maximum(yn, 0.0)


def _forward_ref(features, edge_index, params, out_features,
                 mxu_dtype=jnp.float32):
    V = features.shape[0]
    adj = build_adjacency(edge_index, V)
    x = features.astype(jnp.float32)
    res = (x if features.shape[-1] == out_features
           else nearest_interp_features(x, out_features))
    h = _layer_ref(x, adj, params["first"], res, False, mxu_dtype=mxu_dtype)
    n_hidden = len(params["hidden"])
    for i, p in enumerate(params["hidden"], 1):
        h = _layer_ref(h, adj, p, res, i == n_hidden, mxu_dtype=mxu_dtype)
    return h


if __name__ == "__main__":
    V = 64                 # number of graph vertices
    IN_FEATURES = 16
    OUT_FEATURES = 32
    HIDDEN_LAYER_COUNT = 2
    E = 128                # number of directed edges

    key = jax.random.PRNGKey(0)
    k_feat, k_edge, k_param = jax.random.split(key, 3)

    features = jax.random.normal(k_feat, (V, IN_FEATURES), jnp.float32)
    edge_index = jax.random.randint(k_edge, (2, E), 0, V, jnp.int32)
    params = init_params(k_param, IN_FEATURES, OUT_FEATURES, HIDDEN_LAYER_COUNT)

    out = jax.block_until_ready(
        features2features_residual(features, edge_index, params, OUT_FEATURES))
    assert out.shape == (V, OUT_FEATURES)

    # 1) structure check: reference using the same bf16 MXU-input casts.
    ref_bf16 = _forward_ref(features, edge_index, params, OUT_FEATURES,
                            mxu_dtype=jnp.bfloat16)
    err_b = float(jnp.max(jnp.abs(out - ref_bf16)))
    assert jnp.allclose(out, ref_bf16, atol=2e-2, rtol=2e-2), (
        "mismatch vs bf16-matched reference, max abs err %e" % err_b)

    # 2) semantics check: pure-f32 reference (bf16 MXU inputs add ~1e-2 drift).
    ref_f32 = _forward_ref(features, edge_index, params, OUT_FEATURES,
                           mxu_dtype=jnp.float32)
    err_f = float(jnp.max(jnp.abs(out - ref_f32)))
    assert jnp.allclose(out, ref_f32, atol=1.5e-1, rtol=1.5e-1), (
        "mismatch vs f32 reference, max abs err %e" % err_f)

    print("KERNEL_OK")
</pallas_src>

<mosaic_0001>
module attributes {stable_mosaic.version = 11 : i64} {
  func.func @_resblock_kernel(%arg0: i32, %arg1: memref<64x128xbf16, #tpu.memory_space<vmem>>, %arg2: memref<64x64xbf16, #tpu.memory_space<vmem>>, %arg3: memref<1x128x256xbf16, #tpu.memory_space<vmem>>, %arg4: memref<1x3x128xf32, #tpu.memory_space<vmem>>, %arg5: memref<64x128xf32, #tpu.memory_space<vmem>>, %arg6: memref<64x128xf32, #tpu.memory_space<vmem>>, %arg7: memref<64x128xbf16, #tpu.memory_space<vmem>>) attributes {dimension_semantics = [#tpu.dimension_semantics<arbitrary>], iteration_bounds = array<i64: 3>, scalar_prefetch = 0 : i64, scratch_operands = 1 : i64, tpu.core_type = #tpu.core_type<tc>, window_params = [{pipeline_mode = #tpu.pipeline_mode<synchronous>, transform_indices = @transform_0, window_bounds = array<i64: 64, 128>}, {pipeline_mode = #tpu.pipeline_mode<synchronous>, transform_indices = @transform_1, window_bounds = array<i64: 64, 64>}, {transform_indices = @transform_2, window_bounds = array<i64: 1, 128, 256>}, {transform_indices = @transform_3, window_bounds = array<i64: 1, 3, 128>}, {pipeline_mode = #tpu.pipeline_mode<synchronous>, transform_indices = @transform_4, window_bounds = array<i64: 64, 128>}, {pipeline_mode = #tpu.pipeline_mode<synchronous>, transform_indices = @transform_5, window_bounds = array<i64: 64, 128>}]} {
    %c0_i32 = arith.constant 0 : i32
    %0 = arith.cmpi eq, %arg0, %c0_i32 : i32
    %1 = arith.extui %0 : i1 to i32
    %c0_i32_0 = arith.constant 0 : i32
    %2 = arith.cmpi ne, %1, %c0_i32_0 : i32
    %3 = scf.if %2 -> (vector<64x128xbf16>) {
      %c0_17 = arith.constant 0 : index
      %c0_18 = arith.constant 0 : index
      %47 = vector.load %arg1[%c0_17, %c0_18] : memref<64x128xbf16, #tpu.memory_space<vmem>>, vector<64x128xbf16>
      scf.yield %47 : vector<64x128xbf16>
    } else {
      %c0_17 = arith.constant 0 : index
      %c0_18 = arith.constant 0 : index
      %47 = vector.load %arg7[%c0_17, %c0_18] : memref<64x128xbf16, #tpu.memory_space<vmem>>, vector<64x128xbf16>
      scf.yield %47 : vector<64x128xbf16>
    }
    %c0 = arith.constant 0 : index
    %c0_1 = arith.constant 0 : index
    %c0_2 = arith.constant 0 : index
    %4 = vector.load %arg3[%c0, %c0_1, %c0_2] : memref<1x128x256xbf16, #tpu.memory_space<vmem>>, vector<1x128x256xbf16>
    %5 = vector.shape_cast %4 : vector<1x128x256xbf16> to vector<128x256xbf16>
    %cst = arith.constant dense<0.000000e+00> : vector<64x256xf32>
    %6 = tpu.matmul %3, %5, %cst {dimension_numbers = #tpu.dot_dimension_numbers<[1], [0], [0], [1], [0, 0, 1, 1], [], []>} : vector<64x128xbf16>, vector<128x256xbf16>, vector<64x256xf32> -> vector<64x256xf32>
    %7 = vector.extract_strided_slice %6 {offsets = [0, 0], sizes = [64, 128], strides = [1, 1]} : vector<64x256xf32> to vector<64x128xf32>
    %8 = vector.extract_strided_slice %6 {offsets = [0, 128], sizes = [64, 128], strides = [1, 1]} : vector<64x256xf32> to vector<64x128xf32>
    %c0_3 = arith.constant 0 : index
    %c0_4 = arith.constant 0 : index
    %c0_5 = arith.constant 0 : index
    %9 = vector.load %arg4[%c0_3, %c0_4, %c0_5] : memref<1x3x128xf32, #tpu.memory_space<vmem>>, vector<1x3x128xf32>
    %10 = vector.shape_cast %9 : vector<1x3x128xf32> to vector<3x128xf32>
    %11 = vector.extract_strided_slice %10 {offsets = [0, 0], sizes = [1, 128], strides = [1, 1]} : vector<3x128xf32> to vector<1x128xf32>
    %12 = vector.extract_strided_slice %10 {offsets = [1, 0], sizes = [1, 128], strides = [1, 1]} : vector<3x128xf32> to vector<1x128xf32>
    %13 = vector.extract_strided_slice %10 {offsets = [2, 0], sizes = [1, 128], strides = [1, 1]} : vector<3x128xf32> to vector<1x128xf32>
    %c0_6 = arith.constant 0 : index
    %c0_7 = arith.constant 0 : index
    %14 = vector.load %arg2[%c0_6, %c0_7] : memref<64x64xbf16, #tpu.memory_space<vmem>>, vector<64x64xbf16>
    %15 = vector.broadcast %11 : vector<1x128xf32> to vector<64x128xf32>
    %16 = arith.addf %8, %15 : vector<64x128xf32>
    %17 = arith.truncf %16 : vector<64x128xf32> to vector<64x128xbf16>
    %cst_8 = arith.constant dense<0.000000e+00> : vector<64x128xf32>
    %18 = tpu.matmul %14, %17, %cst_8 {dimension_numbers = #tpu.dot_dimension_numbers<[1], [0], [0], [1], [0, 0, 1, 1], [], []>} : vector<64x64xbf16>, vector<64x128xbf16>, vector<64x128xf32> -> vector<64x128xf32>
    %19 = arith.addf %7, %18 : vector<64x128xf32>
    %cst_9 = arith.constant dense<0.000000e+00> : vector<128xf32>
    %20 = vector.multi_reduction <add>, %19, %cst_9 [0] : vector<64x128xf32> to vector<128xf32>
    %21 = vector.shape_cast %20 : vector<128xf32> to vector<1x128xf32>
    %cst_10 = arith.constant 6.400000e+01 : f32
    %22 = vector.broadcast %cst_10 : f32 to vector<1x128xf32>
    %23 = arith.divf %21, %22 : vector<1x128xf32>
    %24 = vector.broadcast %23 : vector<1x128xf32> to vector<64x128xf32>
    %25 = arith.subf %19, %24 : vector<64x128xf32>
    %26 = arith.mulf %25, %25 : vector<64x128xf32>
    %cst_11 = arith.constant dense<0.000000e+00> : vector<128xf32>
    %27 = vector.multi_reduction <add>, %26, %cst_11 [0] : vector<64x128xf32> to vector<128xf32>
    %28 = vector.shape_cast %27 : vector<128xf32> to vector<1x128xf32>
    %cst_12 = arith.constant 6.400000e+01 : f32
    %29 = vector.broadcast %cst_12 : f32 to vector<1x128xf32>
    %30 = arith.divf %28, %29 : vector<1x128xf32>
    %cst_13 = arith.constant 9.99999974E-6 : f32
    %31 = vector.broadcast %cst_13 : f32 to vector<1x128xf32>
    %32 = arith.addf %30, %31 : vector<1x128xf32>
    %33 = math.rsqrt %32 : vector<1x128xf32>
    %34 = arith.mulf %12, %33 : vector<1x128xf32>
    %35 = arith.mulf %23, %34 : vector<1x128xf32>
    %36 = arith.subf %13, %35 : vector<1x128xf32>
    %37 = vector.broadcast %34 : vector<1x128xf32> to vector<64x128xf32>
    %38 = arith.mulf %19, %37 : vector<64x128xf32>
    %39 = vector.broadcast %36 : vector<1x128xf32> to vector<64x128xf32>
    %40 = arith.addf %38, %39 : vector<64x128xf32>
    %c2_i32 = arith.constant 2 : i32
    %41 = arith.cmpi slt, %arg0, %c2_i32 : i32
    %42 = arith.extui %41 : i1 to i32
    %c0_i32_14 = arith.constant 0 : i32
    %43 = arith.cmpi ne, %42, %c0_i32_14 : i32
    scf.if %43 {
      %cst_17 = arith.constant 0.000000e+00 : f32
      %47 = vector.broadcast %cst_17 : f32 to vector<64x128xf32>
      %48 = arith.maximumf %40, %47 : vector<64x128xf32>
      %49 = arith.truncf %48 : vector<64x128xf32> to vector<64x128xbf16>
      %c0_18 = arith.constant 0 : index
      %c0_19 = arith.constant 0 : index
      %50 = vector.load %arg7[%c0_18, %c0_19] : memref<64x128xbf16, #tpu.memory_space<vmem>>, vector<64x128xbf16>
      tpu.vector_store %arg7[%c0_18, %c0_19], %49 {strides = array<i32>} : memref<64x128xbf16, #tpu.memory_space<vmem>>, vector<64x128xbf16>,
    } else {
    }
    %c2_i32_15 = arith.constant 2 : i32
    %44 = arith.cmpi eq, %arg0, %c2_i32_15 : i32
    %45 = arith.extui %44 : i1 to i32
    %c0_i32_16 = arith.constant 0 : i32
    %46 = arith.cmpi ne, %45, %c0_i32_16 : i32
    scf.if %46 {
      %c0_17 = arith.constant 0 : index
      %c0_18 = arith.constant 0 : index
      %47 = vector.load %arg5[%c0_17, %c0_18] : memref<64x128xf32, #tpu.memory_space<vmem>>, vector<64x128xf32>
      %48 = arith.addf %40, %47 : vector<64x128xf32>
      %cst_19 = arith.constant 0.000000e+00 : f32
      %49 = vector.broadcast %cst_19 : f32 to vector<64x128xf32>
      %50 = arith.maximumf %48, %49 : vector<64x128xf32>
      %c0_20 = arith.constant 0 : index
      %c0_21 = arith.constant 0 : index
      %51 = vector.load %arg6[%c0_20, %c0_21] : memref<64x128xf32, #tpu.memory_space<vmem>>, vector<64x128xf32>
      tpu.vector_store %arg6[%c0_20, %c0_21], %50 {strides = array<i32>} : memref<64x128xf32, #tpu.memory_space<vmem>>, vector<64x128xf32>,
    } else {
    }
    return
  }
  func.func @transform_0(%arg0: i32) -> (i32, i32) {
    %c0_i32 = arith.constant 0 : i32
    %c0_i32_0 = arith.constant 0 : i32
    %c0_i32_1 = arith.constant 0 : i32
    return %c0_i32, %c0_i32_0 : i32, i32
  }
  func.func @transform_1(%arg0: i32) -> (i32, i32) {
    %c0_i32 = arith.constant 0 : i32
    %c0_i32_0 = arith.constant 0 : i32
    %c0_i32_1 = arith.constant 0 : i32
    return %c0_i32, %c0_i32_0 : i32, i32
  }
  func.func @transform_2(%arg0: i32) -> (i32, i32, i32) {
    %c0_i32 = arith.constant 0 : i32
    %c0_i32_0 = arith.constant 0 : i32
    %c0_i32_1 = arith.constant 0 : i32
    return %arg0, %c0_i32, %c0_i32_0 : i32, i32, i32
  }
  func.func @transform_3(%arg0: i32) -> (i32, i32, i32) {
    %c0_i32 = arith.constant 0 : i32
    %c0_i32_0 = arith.constant 0 : i32
    %c0_i32_1 = arith.constant 0 : i32
    return %arg0, %c0_i32, %c0_i32_0 : i32, i32, i32
  }
  func.func @transform_4(%arg0: i32) -> (i32, i32) {
    %c0_i32 = arith.constant 0 : i32
    %c0_i32_0 = arith.constant 0 : i32
    %c0_i32_1 = arith.constant 0 : i32
    return %c0_i32, %c0_i32_0 : i32, i32
  }
  func.func @transform_5(%arg0: i32) -> (i32, i32) {
    %c0_i32 = arith.constant 0 : i32
    %c0_i32_0 = arith.constant 0 : i32
    %c0_i32_1 = arith.constant 0 : i32
    return %c0_i32, %c0_i32_0 : i32, i32
  }
}

</mosaic_0001>

<llo_original>
// kernel: tpu_custom_call.1
$region0: #{tpu_custom_call.1}
  #allocation0 [shape = 'u32[]', space=smem, size = 0x4, offset = 0x4, fixed_abs, tag = 'smem constant byte address 0x4 - core index']
  #allocation1 [shape = 'u32[144,128]{1,0:T(1,128)}', space=vmem, size = 0x12000, scoped, tag = 'internal scratch']
  #allocation2 [shape = 'bf16[64,128]{1,0:T(16,128)(2,1)}', space=vmem, size = 0x4000, scoped, tag = 'scratch operand']
  %s0 = inlined_call_operand.hbm [shape: bf16[64,128], index: 0, kind: input, shape index: {}]
  %s1 = inlined_call_operand.hbm [shape: bf16[64,64], index: 1, kind: input, shape index: {}]
  %s2 = inlined_call_operand.hbm [shape: bf16[3,128,256], index: 2, kind: input, shape index: {}]
  %s3 = inlined_call_operand.hbm [shape: f32[3,3,128], index: 3, kind: input, shape index: {}]
  %s4 = inlined_call_operand.hbm [shape: f32[64,128], index: 4, kind: input, shape index: {}]
  %s5 = inlined_call_operand.hbm [shape: f32[64,128], index: 5, kind: output, shape index: {}]
  %s6 = sld [smem:[#allocation0]]
  $region89: #{tpu_custom_call.1} parent=0
    _
  %s8 = ssub.s32 1, %s6
  %s9 = scalar_select 0, %s8, %s6
  $region1: #{tpu_custom_call.1} parent=0
    #allocation3 [shape = 'u8[16384]{0}', space=vmem, size = 0x4000, scoped, tag = 'input window, operand 0, single buffered']
    #allocation4 [shape = 's32[2]{0}', space=sflag, size = 0x8, scoped, tag = 'scoped memory for tpu_custom_call.1']
    #allocation5 [shape = 's32[2]{0}', space=sflag, size = 0x8, scoped, tag = 'scoped memory for tpu_custom_call.1']
    #allocation6 [shape = 'u8[16384]{0}', space=vmem, size = 0x4000, scoped, tag = 'input window, operand 1, single buffered']
    #allocation7 [shape = 's32[1]{0}', space=sflag, size = 0x4, scoped, tag = 'scoped memory for tpu_custom_call.1']
    #allocation8 [shape = 'u8[131072]{0}', space=vmem, size = 0x20000, scoped, tag = 'input window, operand 2']
    #allocation9 [shape = 'u8[4096]{0}', space=vmem, size = 0x1000, scoped, tag = 'input window, operand 3']
    #allocation10 [shape = 'u8[32768]{0}', space=vmem, size = 0x8000, scoped, tag = 'input window, operand 4, single buffered']
    #allocation11 [shape = 'u8[32768]{0}', space=vmem, size = 0x8000, scoped, tag = 'output window, operand 0, single buffered']
    %10 = vsyncpa [#allocation4], 0
    %11 = vsyncpa [#allocation7], 0
    %12 = vsyncpa [#allocation5], 0
    loop: start=0, step=1, limit=5
    $region2: #{tpu_custom_call.1} parent=1 // loop_pre_header
      _
    $region3: #{tpu_custom_call.1} parent=1 // loop_header
      %s14 = sphi 0, %s18
      %p15 = scmp.ge.s32.totalorder %s14, 5
      %s22 = sphi 0, %s22
      %s24 = sphi 0, %s22
      %s25 = sphi 0, %s24
      %s39 = sphi 0, %s25
      %s43 = sphi 0, %s43
      %s45 = sphi 0, %s43
      %s46 = sphi 0, %s45
      %s60 = sphi 0, %s46
      %s66 = sphi 0, %s68
      %s69 = sphi 0, %s66
      %s70 = sphi 0, %s69
      %s86 = sphi 0, %s70
      %s92 = sphi 0, %s94
      %s95 = sphi 0, %s92
      %s96 = sphi 0, %s95
      %s112 = sphi 0, %s96
      %s116 = sphi 0, %s116
      %s118 = sphi 0, %s116
      %s119 = sphi 0, %s118
      %s133 = sphi 0, %s119
      %s137 = sphi 0, %s137
      %s139 = sphi 0, %s137
      %s140 = sphi 0, %s139
      %s154 = sphi 0, %s140
    $region4: #{tpu_custom_call.1} parent=1 // loop_header_branch
      %17 = sbr.rel (%p15) target = $region8
    $region5: #{tpu_custom_call.1} parent=1 // loop_body
      %s19 = ssub.s32 %s14, 1
      %s20 = ssub.s32 %s14, 2
      %s21 = sadd.s32 %s14, 1
      %s23 = sadd.s32 %s22, 1
      %p26 = scmp.eq.s32.totalorder %s14, 2
      %p27 = scmp.ne.s32.totalorder %s22, %s24
      %p28 = scmp.eq.s32.totalorder %s14, 0
      %p29 = por %p27, %p28
      %p30 = scmp.ne.s32.totalorder %s22, %s24
      %p31 = scmp.eq.s32.totalorder %s19, 2
      %p32 = por %p30, %p31
      %p33 = scmp.ne.s32.totalorder %s24, %s25
      %p34 = scmp.eq.s32.totalorder %s19, 0
      %p35 = por %p33, %p34
      %p36 = scmp.ne.s32.totalorder %s24, %s25
      %p37 = scmp.eq.s32.totalorder %s20, 2
      %p38 = por %p36, %p37
      %p40 = scmp.ne.s32.totalorder %s25, %s39
      %p41 = scmp.eq.s32.totalorder %s20, 0
      %p42 = por %p40, %p41
      %s44 = sadd.s32 %s43, 1
      %p47 = scmp.eq.s32.totalorder %s14, 2
      %p48 = scmp.ne.s32.totalorder %s43, %s45
      %p49 = scmp.eq.s32.totalorder %s14, 0
      %p50 = por %p48, %p49
      %p51 = scmp.ne.s32.totalorder %s43, %s45
      %p52 = scmp.eq.s32.totalorder %s19, 2
      %p53 = por %p51, %p52
      %p54 = scmp.ne.s32.totalorder %s45, %s46
      %p55 = scmp.eq.s32.totalorder %s19, 0
      %p56 = por %p54, %p55
      %p57 = scmp.ne.s32.totalorder %s45, %s46
      %p58 = scmp.eq.s32.totalorder %s20, 2
      %p59 = por %p57, %p58
      %p61 = scmp.ne.s32.totalorder %s46, %s60
      %p62 = scmp.eq.s32.totalorder %s20, 0
      %p63 = por %p61, %p62
      %s64 = ssub.s32 %s14, %s21
      %p65 = scmp.eq.s32.totalorder %s64, 0
      %s67 = sadd.s32 %s66, 1
      %s68 = scalar_select %p65, %s66, %s67
      %p71 = pneg %p65
      %p72 = scmp.eq.s32.totalorder %s14, 2
      %p73 = por %p71, %p72
      %p74 = scmp.ne.s32.totalorder %s66, %s69
      %p75 = scmp.eq.s32.totalorder %s14, 0
      %p76 = por %p74, %p75
      %p77 = scmp.ne.s32.totalorder %s66, %s69
      %p78 = scmp.eq.s32.totalorder %s19, 2
      %p79 = por %p77, %p78
      %p80 = scmp.ne.s32.totalorder %s69, %s70
      %p81 = scmp.eq.s32.totalorder %s19, 0
      %p82 = por %p80, %p81
      %p83 = scmp.ne.s32.totalorder %s69, %s70
      %p84 = scmp.eq.s32.totalorder %s20, 2
      %p85 = por %p83, %p84
      %p87 = scmp.ne.s32.totalorder %s70, %s86
      %p88 = scmp.eq.s32.totalorder %s20, 0
      %p89 = por %p87, %p88
      %s90 = ssub.s32 %s14, %s21
      %p91 = scmp.eq.s32.totalorder %s90, 0
      %s93 = sadd.s32 %s92, 1
      %s94 = scalar_select %p91, %s92, %s93
      %p97 = pneg %p91
      %p98 = scmp.eq.s32.totalorder %s14, 2
      %p99 = por %p97, %p98
      %p100 = scmp.ne.s32.totalorder %s92, %s95
      %p101 = scmp.eq.s32.totalorder %s14, 0
      %p102 = por %p100, %p101
      %p103 = scmp.ne.s32.totalorder %s92, %s95
      %p104 = scmp.eq.s32.totalorder %s19, 2
      %p105 = por %p103, %p104
      %p106 = scmp.ne.s32.totalorder %s95, %s96
      %p107 = scmp.eq.s32.totalorder %s19, 0
      %p108 = por %p106, %p107
      %p109 = scmp.ne.s32.totalorder %s95, %s96
      %p110 = scmp.eq.s32.totalorder %s20, 2
      %p111 = por %p109, %p110
      %p113 = scmp.ne.s32.totalorder %s96, %s112
      %p114 = scmp.eq.s32.totalorder %s20, 0
      %p115 = por %p113, %p114
      %s117 = sadd.s32 %s116, 1
      %p120 = scmp.eq.s32.totalorder %s14, 2
      %p121 = scmp.ne.s32.totalorder %s116, %s118
      %p122 = scmp.eq.s32.totalorder %s14, 0
      %p123 = por %p121, %p122
      %p124 = scmp.ne.s32.totalorder %s116, %s118
      %p125 = scmp.eq.s32.totalorder %s19, 2
      %p126 = por %p124, %p125
      %p127 = scmp.ne.s32.totalorder %s118, %s119
      %p128 = scmp.eq.s32.totalorder %s19, 0
      %p129 = por %p127, %p128
      %p130 = scmp.ne.s32.totalorder %s118, %s119
      %p131 = scmp.eq.s32.totalorder %s20, 2
      %p132 = por %p130, %p131
      %p134 = scmp.ne.s32.totalorder %s119, %s133
      %p135 = scmp.eq.s32.totalorder %s20, 0
      %p136 = por %p134, %p135
      %s138 = sadd.s32 %s137, 1
      %p141 = scmp.eq.s32.totalorder %s14, 2
      %p142 = scmp.ne.s32.totalorder %s137, %s139
      %p143 = scmp.eq.s32.totalorder %s14, 0
      %p144 = por %p142, %p143
      %p145 = scmp.ne.s32.totalorder %s137, %s139
      %p146 = scmp.eq.s32.totalorder %s19, 2
      %p147 = por %p145, %p146
      %p148 = scmp.ne.s32.totalorder %s139, %s140
      %p149 = scmp.eq.s32.totalorder %s19, 0
      %p150 = por %p148, %p149
      %p151 = scmp.ne.s32.totalorder %s139, %s140
      %p152 = scmp.eq.s32.totalorder %s20, 2
      %p153 = por %p151, %p152
      %p155 = scmp.ne.s32.totalorder %s140, %s154
      %p156 = scmp.eq.s32.totalorder %s20, 0
      %p157 = por %p155, %p156
      %p158 = scmp.le.s32.totalorder 1, %s14
      %p159 = scmp.lt.s32.totalorder %s14, 4
      %p160 = pnand %p158, %p159
      %p161 = pneg %p160
      // Predicated region
      $region9: #{tpu_custom_call.1} parent=5 // pred_check
        _
      $region10: #{tpu_custom_call.1} parent=5 // pred_check_branch
        %163 = sbr.rel (%p160) target = $region12
      $region11: #{tpu_custom_call.1} parent=5 // pred_region
        %s164 = ssub.s32 %s14, 1
        // Predicated region
        $region13: #{tpu_custom_call.1} parent=11 // pred_check
          %p165 = pneg %p35
        $region14: #{tpu_custom_call.1} parent=11 // pred_check_branch
          %167 = sbr.rel (%p165) target = $region16
        $region15: #{tpu_custom_call.1} parent=11 // pred_region
          %s169 = ssub.s32 512, 512
          %170 = vsyncadd [#allocation4], %s169
          %s171 = sshll.u32 [#allocation3], 4
          %s172 = int_to_ptr.vmem [resolvable:$true] %s171
          %177 = dma.hbm_to_vmem [thread:$0]  %s0, 512, %s172, [#allocation4], 64, 64, 4
        $region16: #{tpu_custom_call.1} parent=11 // pred_fallthru
          _
        // Predicated region
        $region17: #{tpu_custom_call.1} parent=11 // pred_check
          %p178 = pneg %p56
        $region18: #{tpu_custom_call.1} parent=11 // pred_check_branch
          %180 = sbr.rel (%p178) target = $region20
        $region19: #{tpu_custom_call.1} parent=11 // pred_region
          %s182 = ssub.s32 512, 512
          %183 = vsyncadd [#allocation7], %s182
          %s184 = sshll.u32 [#allocation6], 4
          %s185 = int_to_ptr.vmem [resolvable:$true] %s184
          %190 = dma.hbm_to_vmem [thread:$0]  %s1, 512, %s185, [#allocation7], 64, 64, 4
        $region20: #{tpu_custom_call.1} parent=11 // pred_fallthru
          _
        // Predicated region
        $region21: #{tpu_custom_call.1} parent=11 // pred_check
          %p191 = pneg %p129
        $region22: #{tpu_custom_call.1} parent=11 // pred_check_branch
          %193 = sbr.rel (%p191) target = $region24
        $region23: #{tpu_custom_call.1} parent=11 // pred_region
          %s195 = ssub.s32 1024, 1024
          %196 = vsyncadd [#allocation7], %s195
          %s197 = sshll.u32 [#allocation10], 4
          %s198 = int_to_ptr.vmem [resolvable:$true] %s197
          %203 = dma.hbm_to_vmem [thread:$0]  %s4, 1024, %s198, [#allocation7], 128, 128, 8
        $region24: #{tpu_custom_call.1} parent=11 // pred_fallthru
          _
      $region12: #{tpu_custom_call.1} parent=5 // pred_fallthru
        _
      %p204 = scmp.lt.s32.totalorder %s14, 3
      // Predicated region
      $region25: #{tpu_custom_call.1} parent=5 // pred_check
        %p205 = pneg %p204
      $region26: #{tpu_custom_call.1} parent=5 // pred_check_branch
        %207 = sbr.rel (%p205) target = $region28
      $region27: #{tpu_custom_call.1} parent=5 // pred_region
        // Predicated region
        $region29: #{tpu_custom_call.1} parent=27 // pred_check
          %p208 = pneg %p76
        $region30: #{tpu_custom_call.1} parent=27 // pred_check_branch
          %210 = sbr.rel (%p208) target = $region32
        $region31: #{tpu_custom_call.1} parent=27 // pred_region
          %s211 = sand.u32 %s14, 1
          %s212 = scalar_lea.sflag [#allocation4], %s211
          %s213 = sand.u32 %s66, 1
          %s214 = smul.addr %s213, 128
          %s215 = scalar_lea.vmem [#allocation8], %s214
          %s217 = ssub.s32 2048, 2048
          %218 = vsyncadd %s212, %s217
          %s219 = smul.addr %s14, 32
          %s220 = smul.addr %s219, 64
          %s221 = scalar_lea.hbm %s2, %s220
          %s222 = sshll.u32 %s215, 4
          %s223 = int_to_ptr.vmem [resolvable:$true] %s222
          %228 = dma.hbm_to_vmem [thread:$0]  %s221, 2048, %s223, %s212, 128, 128, 8
        $region32: #{tpu_custom_call.1} parent=27 // pred_fallthru
          _
        // Predicated region
        $region33: #{tpu_custom_call.1} parent=27 // pred_check
          %p229 = pneg %p102
        $region34: #{tpu_custom_call.1} parent=27 // pred_check_branch
          %231 = sbr.rel (%p229) target = $region36
        $region35: #{tpu_custom_call.1} parent=27 // pred_region
          %s232 = sand.u32 %s14, 1
          %s233 = scalar_lea.sflag [#allocation4], %s232
          %s234 = sand.u32 %s92, 1
          %s235 = smul.addr %s234, 4
          %s236 = scalar_lea.vmem [#allocation9], %s235
          %s238 = ssub.s32 64, 64
          %239 = vsyncadd %s233, %s238
          %s240 = smul.addr %s14, 64
          %s241 = scalar_lea.hbm %s3, %s240
          %s243 = sshll.u32 %s236, 4
          %s244 = int_to_ptr.vmem [resolvable:$true] %s243
          %246 = dma.hbm_to_vmem [thread:$0]  %s241, 64, %s244, %s233
        $region36: #{tpu_custom_call.1} parent=27 // pred_fallthru
          _
      $region28: #{tpu_custom_call.1} parent=5 // pred_fallthru
        _
      %p247 = scmp.le.s32.totalorder 1, %s14
      %p248 = scmp.lt.s32.totalorder %s14, 4
      %p249 = pnand %p247, %p248
      %p250 = pneg %p249
      // Predicated region
      $region37: #{tpu_custom_call.1} parent=5 // pred_check
        _
      $region38: #{tpu_custom_call.1} parent=5 // pred_check_branch
        %252 = sbr.rel (%p249) target = $region40
      $region39: #{tpu_custom_call.1} parent=5 // pred_region
        %s253 = ssub.s32 %s14, 1
        // Predicated region
        $region41: #{tpu_custom_call.1} parent=39 // pred_check
          %p254 = pneg %p35
        $region42: #{tpu_custom_call.1} parent=39 // pred_check_branch
          %256 = sbr.rel (%p254) target = $region44
        $region43: #{tpu_custom_call.1} parent=39 // pred_region
          %257 = dma.done [#allocation4], 512
        $region44: #{tpu_custom_call.1} parent=39 // pred_fallthru
          _
        // Predicated region
        $region45: #{tpu_custom_call.1} parent=39 // pred_check
          %p258 = pneg %p56
        $region46: #{tpu_custom_call.1} parent=39 // pred_check_branch
          %260 = sbr.rel (%p258) target = $region48
        $region47: #{tpu_custom_call.1} parent=39 // pred_region
          %261 = dma.done [#allocation7], 512
        $region48: #{tpu_custom_call.1} parent=39 // pred_fallthru
          _
        %s262 = sand.u32 %s19, 1
        %s263 = scalar_lea.sflag [#allocation4], %s262
        %s264 = sand.u32 %s69, 1
        %s265 = smul.addr %s264, 128
        %s266 = scalar_lea.vmem [#allocation8], %s265
        // Predicated region
        $region49: #{tpu_custom_call.1} parent=39 // pred_check
          %p267 = pneg %p82
        $region50: #{tpu_custom_call.1} parent=39 // pred_check_branch
          %269 = sbr.rel (%p267) target = $region52
        $region51: #{tpu_custom_call.1} parent=39 // pred_region
          %270 = dma.done %s263, 2048
        $region52: #{tpu_custom_call.1} parent=39 // pred_fallthru
          _
        %s271 = sand.u32 %s19, 1
        %s272 = scalar_lea.sflag [#allocation4], %s271
        %s273 = sand.u32 %s95, 1
        %s274 = smul.addr %s273, 4
        %s275 = scalar_lea.vmem [#allocation9], %s274
        // Predicated region
        $region53: #{tpu_custom_call.1} parent=39 // pred_check
          %p276 = pneg %p108
        $region54: #{tpu_custom_call.1} parent=39 // pred_check_branch
          %278 = sbr.rel (%p276) target = $region56
        $region55: #{tpu_custom_call.1} parent=39 // pred_region
          %279 = dma.done %s272, 64
        $region56: #{tpu_custom_call.1} parent=39 // pred_fallthru
          _
        // Predicated region
        $region57: #{tpu_custom_call.1} parent=39 // pred_check
          %p280 = pneg %p129
        $region58: #{tpu_custom_call.1} parent=39 // pred_check_branch
          %282 = sbr.rel (%p280) target = $region60
        $region59: #{tpu_custom_call.1} parent=39 // pred_region
          %283 = dma.done [#allocation7], 1024
        $region60: #{tpu_custom_call.1} parent=39 // pred_fallthru
          _
        %p284 = pneg %p35
        %p285 = pneg %p32
        %p286 = pneg %p56
        %p287 = pneg %p53
        %s288 = sand.u32 %s19, 1
        %s289 = scalar_lea.sflag [#allocation4], %s288
        %s290 = sand.u32 %s69, 1
        %s291 = smul.addr %s290, 128
        %s292 = scalar_lea.vmem [#allocation8], %s291
        %p293 = pneg %p82
        %p294 = pneg %p79
        %s295 = sand.u32 %s19, 1
        %s296 = scalar_lea.sflag [#allocation4], %s295
        %s297 = sand.u32 %s95, 1
        %s298 = smul.addr %s297, 4
        %s299 = scalar_lea.vmem [#allocation9], %s298
        %p300 = pneg %p108
        %p301 = pneg %p105
        %p302 = pneg %p129
        %p303 = pneg %p126
        %p304 = pneg %p150
        %p305 = pneg %p147
        %p307 = scmp.eq.s32.totalorder %s19, 0
        // Predicated region
        $region61: #{tpu_custom_call.1} parent=39 // pred_check
          %p308 = pneg %p307
        $region62: #{tpu_custom_call.1} parent=39 // pred_check_branch
          %310 = sbr.rel (%p308) target = $region64
        $region63: #{tpu_custom_call.1} parent=39 // pred_region
          %v311 = vld [vmem:[#allocation3] sm:$0xf]
          %v312 = vld [vmem:[#allocation3 + $0x4] sm:$0xf]
          %v313 = vld [vmem:[#allocation3 + $0x8] sm:$0xf]
          %v314 = vld [vmem:[#allocation3 + $0xc] sm:$0xf]
          %v315 = vld [vmem:[#allocation3 + $0x10] sm:$0xf]
          %v316 = vld [vmem:[#allocation3 + $0x14] sm:$0xf]
          %v317 = vld [vmem:[#allocation3 + $0x18] sm:$0xf]
          %v318 = vld [vmem:[#allocation3 + $0x1c] sm:$0xf]
          %v327 = vunpack.c.l.b16 %v311
          %v328 = vunpack.c.l.b16 %v312
          %v329 = vunpack.c.l.b16 %v313
          %v330 = vunpack.c.l.b16 %v314
          %v331 = vunpack.c.l.b16 %v315
          %v332 = vunpack.c.l.b16 %v316
          %v333 = vunpack.c.l.b16 %v317
          %v334 = vunpack.c.l.b16 %v318
          %v335 = vpack.c.b16 %v328, %v327
          %v336 = vpack.c.b16 %v330, %v329
          %v337 = vpack.c.b16 %v332, %v331
          %v338 = vpack.c.b16 %v334, %v333
        $region64: #{tpu_custom_call.1} parent=39 // pred_fallthru
          %v343 = vphi 0, %v335
          %v344 = vphi 0, %v336
          %v345 = vphi 0, %v337
          %v346 = vphi 0, %v338
        %p347 = pneg %p307
        // Predicated region
        $region65: #{tpu_custom_call.1} parent=39 // pred_check
          _
        $region66: #{tpu_custom_call.1} parent=39 // pred_check_branch
          %349 = sbr.rel (%p307) target = $region68
        $region67: #{tpu_custom_call.1} parent=39 // pred_region
          %v350 = vld [vmem:[#allocation2] sm:$0xff]
          %v351 = vld [vmem:[#allocation2 + $0x8] sm:$0xff]
          %v352 = vld [vmem:[#allocation2 + $0x10] sm:$0xff]
          %v353 = vld [vmem:[#allocation2 + $0x18] sm:$0xff]
        $region68: #{tpu_custom_call.1} parent=39 // pred_fallthru
          %v354 = vphi %v343, %v350
          %v355 = vphi %v344, %v351
          %v356 = vphi %v345, %v352
          %v357 = vphi %v346, %v353
        %v358 = vld [vmem:[%s266] sm:$0xff]
        %v359 = vld [vmem:[%s266 + $0x8] sm:$0xff]
        %v360 = vld [vmem:[%s266 + $0x10] sm:$0xff]
        %v361 = vld [vmem:[%s266 + $0x18] sm:$0xff]
        %v362 = vld [vmem:[%s266 + $0x20] sm:$0xff]
        %v363 = vld [vmem:[%s266 + $0x28] sm:$0xff]
        %v364 = vld [vmem:[%s266 + $0x30] sm:$0xff]
        %v365 = vld [vmem:[%s266 + $0x38] sm:$0xff]
        %v366 = vld [vmem:[%s266 + $0x40] sm:$0xff]
        %v367 = vld [vmem:[%s266 + $0x48] sm:$0xff]
        %v368 = vld [vmem:[%s266 + $0x50] sm:$0xff]
        %v369 = vld [vmem:[%s266 + $0x58] sm:$0xff]
        %v370 = vld [vmem:[%s266 + $0x60] sm:$0xff]
        %v371 = vld [vmem:[%s266 + $0x68] sm:$0xff]
        %v372 = vld [vmem:[%s266 + $0x70] sm:$0xff]
        %v373 = vld [vmem:[%s266 + $0x78] sm:$0xff]
        %v390 = vunpack.c.l.b16 %v358
        %v391 = vunpack.c.h.b16 %v358
        %v392 = vunpack.c.l.b16 %v359
        %v393 = vunpack.c.h.b16 %v359
        %v394 = vunpack.c.l.b16 %v360
        %v395 = vunpack.c.h.b16 %v360
        %v396 = vunpack.c.l.b16 %v361
        %v397 = vunpack.c.h.b16 %v361
        %v398 = vunpack.c.l.b16 %v362
        %v399 = vunpack.c.h.b16 %v362
        %v400 = vunpack.c.l.b16 %v363
        %v401 = vunpack.c.h.b16 %v363
        %v402 = vunpack.c.l.b16 %v364
        %v403 = vunpack.c.h.b16 %v364
        %v404 = vunpack.c.l.b16 %v365
        %v405 = vunpack.c.h.b16 %v365
        %v406 = vunpack.c.l.b16 %v366
        %v407 = vunpack.c.h.b16 %v366
        %v408 = vunpack.c.l.b16 %v367
        %v409 = vunpack.c.h.b16 %v367
        %v410 = vunpack.c.l.b16 %v368
        %v411 = vunpack.c.h.b16 %v368
        %v412 = vunpack.c.l.b16 %v369
        %v413 = vunpack.c.h.b16 %v369
        %v414 = vunpack.c.l.b16 %v370
        %v415 = vunpack.c.h.b16 %v370
        %v416 = vunpack.c.l.b16 %v371
        %v417 = vunpack.c.h.b16 %v371
        %v418 = vunpack.c.l.b16 %v372
        %v419 = vunpack.c.h.b16 %v372
        %v420 = vunpack.c.l.b16 %v373
        %v421 = vunpack.c.h.b16 %v373
        %v422 = vpack.c.b16 %v392, %v390
        %v423 = vpack.c.b16 %v393, %v391
        %v424 = vpack.c.b16 %v396, %v394
        %v425 = vpack.c.b16 %v397, %v395
        %v426 = vpack.c.b16 %v400, %v398
        %v427 = vpack.c.b16 %v401, %v399
        %v428 = vpack.c.b16 %v404, %v402
        %v429 = vpack.c.b16 %v405, %v403
        %v430 = vpack.c.b16 %v408, %v406
        %v431 = vpack.c.b16 %v409, %v407
        %v432 = vpack.c.b16 %v412, %v410
        %v433 = vpack.c.b16 %v413, %v411
        %v434 = vpack.c.b16 %v416, %v414
        %v435 = vpack.c.b16 %v417, %v415
        %v436 = vpack.c.b16 %v420, %v418
        %v437 = vpack.c.b16 %v421, %v419
        %454 = vmatprep.subr.bf16.mxu0 %v423
        %455 = vmatpush1.bf16.msra.mxu0 %v422
        %456 = vmatprep.subr.bf16.mxu0 %v425
        %457 = vmatpush1.bf16.msra.mxu0 %v424
        %458 = vmatprep.subr.bf16.mxu0 %v427
        %459 = vmatpush1.bf16.msra.mxu0 %v426
        %460 = vmatprep.subr.bf16.mxu0 %v429
        %461 = vmatpush1.bf16.msra.mxu0 %v428
        %462 = vmatprep.subr.bf16.mxu0 %v431
        %463 = vmatpush1.bf16.msra.mxu0 %v430
        %464 = vmatprep.subr.bf16.mxu0 %v433
        %465 = vmatpush1.bf16.msra.mxu0 %v432
        %466 = vmatprep.subr.bf16.mxu0 %v435
        %467 = vmatpush1.bf16.msra.mxu0 %v434
        %468 = vmatprep.subr.bf16.mxu0 %v437
        %469 = vmatpush1.bf16.msra.mxu0 %v436
        %470 = vmatprep.subr.bf16.mxu0 0
        %471 = vmatpush1.bf16.msra.mxu0 0
        %472 = vmatprep.subr.bf16.mxu0 0
        %473 = vmatpush1.bf16.msra.mxu0 0
        %474 = vmatprep.subr.bf16.mxu0 0
        %475 = vmatpush1.bf16.msra.mxu0 0
        %476 = vmatprep.subr.bf16.mxu0 0
        %477 = vmatpush1.bf16.msra.mxu0 0
        %478 = vmatprep.subr.bf16.mxu0 0
        %479 = vmatpush1.bf16.msra.mxu0 0
        %480 = vmatprep.subr.bf16.mxu0 0
        %481 = vmatpush1.bf16.msra.mxu0 0
        %482 = vmatprep.subr.bf16.mxu0 0
        %483 = vmatpush1.bf16.msra.mxu0 0
        %484 = vmatprep.subr.bf16.mxu0 0
        %485 = vmatpush1.bf16.msra.mxu0 0
        %486 = vmatprep.mubr.bf16.mxu0 0
        %487 = vmatmul.mubr.bf16.gmra.mrb[0].mxu0 %v354
        %v488 = vpop.f32.mrb[0].mxu0
        %v489 = vadd.f32 0.0, %v488
        %v490 = vpop.f32.mrb[0].mxu0
        %v491 = vadd.f32 0.0, %v490
        %v492 = vpop.f32.mrb[0].mxu0
        %v493 = vadd.f32 0.0, %v492
        %v494 = vpop.f32.mrb[0].mxu0
        %v495 = vadd.f32 0.0, %v494
        %496 = vmatprep.mubr.bf16.mxu0 0
        %497 = vmatmul.mubr.bf16.gmra.mrb[0].mxu0 %v355
        %v498 = vpop.f32.mrb[0].mxu0
        %v499 = vadd.f32 0.0, %v498
        %v500 = vpop.f32.mrb[0].mxu0
        %v501 = vadd.f32 0.0, %v500
        %v502 = vpop.f32.mrb[0].mxu0
        %v503 = vadd.f32 0.0, %v502
        %v504 = vpop.f32.mrb[0].mxu0
        %v505 = vadd.f32 0.0, %v504
        %506 = vmatprep.mubr.bf16.mxu0 0
        %507 = vmatmul.mubr.bf16.gmra.mrb[0].mxu0 %v356
        %v508 = vpop.f32.mrb[0].mxu0
        %v509 = vadd.f32 0.0, %v508
        %v510 = vpop.f32.mrb[0].mxu0
        %v511 = vadd.f32 0.0, %v510
        %v512 = vpop.f32.mrb[0].mxu0
        %v513 = vadd.f32 0.0, %v512
        %v514 = vpop.f32.mrb[0].mxu0
        %v515 = vadd.f32 0.0, %v514
        %516 = vmatprep.mubr.bf16.mxu0 0
        %517 = vmatmul.mubr.bf16.gmra.mrb[0].mxu0 %v357
        %v518 = vpop.f32.mrb[0].mxu0
        %v519 = vadd.f32 0.0, %v518
        %v520 = vpop.f32.mrb[0].mxu0
        %v521 = vadd.f32 0.0, %v520
        %v522 = vpop.f32.mrb[0].mxu0
        %v523 = vadd.f32 0.0, %v522
        %v524 = vpop.f32.mrb[0].mxu0
        %v525 = vadd.f32 0.0, %v524
        %526 = vdwg.mxu0
        %v527 = vld [vmem:[%s275] sm:$0x7]
        %v528 = vld [vmem:[#allocation6] sm:$0xf]
        %v529 = vld [vmem:[#allocation6 + $0x4] sm:$0xf]
        %v530 = vld [vmem:[#allocation6 + $0x8] sm:$0xf]
        %v531 = vld [vmem:[#allocation6 + $0xc] sm:$0xf]
        %v532 = vld [vmem:[#allocation6 + $0x10] sm:$0xf]
        %v533 = vld [vmem:[#allocation6 + $0x14] sm:$0xf]
        %v534 = vld [vmem:[#allocation6 + $0x18] sm:$0xf]
        %v535 = vld [vmem:[#allocation6 + $0x1c] sm:$0xf]
        %v536 = vlaneseq
        %v537 = vshrl.u32 %v536, 7
        %v538 = vsub.s32 0, %v537
        %v539 = vrot.slane %v527, %v538
        %v540 = vadd.f32 %v491, %v539
        %v541 = vadd.f32 %v495, %v539
        %v542 = vadd.f32 %v501, %v539
        %v543 = vadd.f32 %v505, %v539
        %v544 = vadd.f32 %v511, %v539
        %v545 = vadd.f32 %v515, %v539
        %v546 = vadd.f32 %v521, %v539
        %v547 = vadd.f32 %v525, %v539
        %v548 = vpack.c.bf16 %v541, %v540
        %v549 = vpack.c.bf16 %v543, %v542
        %v550 = vpack.c.bf16 %v545, %v544
        %v551 = vpack.c.bf16 %v547, %v546
        %v560 = vunpack.c.l.b16 %v528
        %v561 = vunpack.c.l.b16 %v529
        %v562 = vunpack.c.l.b16 %v530
        %v563 = vunpack.c.l.b16 %v531
        %v564 = vunpack.c.l.b16 %v532
        %v565 = vunpack.c.l.b16 %v533
        %v566 = vunpack.c.l.b16 %v534
        %v567 = vunpack.c.l.b16 %v535
        %v568 = vpack.c.b16 %v561, %v560
        %v569 = vpack.c.b16 %v563, %v562
        %v570 = vpack.c.b16 %v565, %v564
        %v571 = vpack.c.b16 %v567, %v566
        %vm572 = vcmask 523264
        %v574 = vsel %vm572, %v568, 0
        %v577 = vsel %vm572, %v569, 0
        %v580 = vsel %vm572, %v570, 0
        %v583 = vsel %vm572, %v571, 0
        %585 = vmatprep.subr.bf16.mxu0 0
        %586 = vmatpush1.bf16.msra.mxu0 %v548
        %587 = vmatprep.subr.bf16.mxu0 0
        %588 = vmatpush1.bf16.msra.mxu0 %v549
        %589 = vmatprep.subr.bf16.mxu0 0
        %590 = vmatpush1.bf16.msra.mxu0 %v550
        %591 = vmatprep.subr.bf16.mxu0 0
        %592 = vmatpush1.bf16.msra.mxu0 %v551
        %593 = vmatprep.subr.bf16.mxu0 0
        %594 = vmatpush1.bf16.msra.mxu0 0
        %595 = vmatprep.subr.bf16.mxu0 0
        %596 = vmatpush1.bf16.msra.mxu0 0
        %597 = vmatprep.subr.bf16.mxu0 0
        %598 = vmatpush1.bf16.msra.mxu0 0
        %599 = vmatprep.subr.bf16.mxu0 0
        %600 = vmatpush1.bf16.msra.mxu0 0
        %601 = vmatprep.subr.bf16.mxu0 0
        %602 = vmatpush1.bf16.msra.mxu0 0
        %603 = vmatprep.subr.bf16.mxu0 0
        %604 = vmatpush1.bf16.msra.mxu0 0
        %605 = vmatprep.subr.bf16.mxu0 0
        %606 = vmatpush1.bf16.msra.mxu0 0
        %607 = vmatprep.subr.bf16.mxu0 0
        %608 = vmatpush1.bf16.msra.mxu0 0
        %609 = vmatprep.subr.bf16.mxu0 0
        %610 = vmatpush1.bf16.msra.mxu0 0
        %611 = vmatprep.subr.bf16.mxu0 0
        %612 = vmatpush1.bf16.msra.mxu0 0
        %613 = vmatprep.subr.bf16.mxu0 0
        %614 = vmatpush1.bf16.msra.mxu0 0
        %615 = vmatprep.subr.bf16.mxu0 0
        %616 = vmatpush1.bf16.msra.mxu0 0
        %617 = vmatprep.mubr.bf16.mxu0 0
        %618 = vmatmul.mubr.bf16.gmra.mrb[0].mxu0 %v574
        %v619 = vpop.f32.mrb[0].mxu0
        %v620 = vadd.f32 0.0, %v619
        %v621 = vpop.f32.mrb[0].mxu0
        %v622 = vpop.f32.mrb[0].mxu0
        %v623 = vadd.f32 0.0, %v622
        %v624 = vpop.f32.mrb[0].mxu0
        %625 = vmatprep.mubr.bf16.mxu0 0
        %626 = vmatmul.mubr.bf16.gmra.mrb[0].mxu0 %v577
        %v627 = vpop.f32.mrb[0].mxu0
        %v628 = vadd.f32 0.0, %v627
        %v629 = vpop.f32.mrb[0].mxu0
        %v630 = vpop.f32.mrb[0].mxu0
        %v631 = vadd.f32 0.0, %v630
        %v632 = vpop.f32.mrb[0].mxu0
        %633 = vmatprep.mubr.bf16.mxu0 0
        %634 = vmatmul.mubr.bf16.gmra.mrb[0].mxu0 %v580
        %v635 = vpop.f32.mrb[0].mxu0
        %v636 = vadd.f32 0.0, %v635
        %v637 = vpop.f32.mrb[0].mxu0
        %v638 = vpop.f32.mrb[0].mxu0
        %v639 = vadd.f32 0.0, %v638
        %v640 = vpop.f32.mrb[0].mxu0
        %641 = vmatprep.mubr.bf16.mxu0 0
        %642 = vmatmul.mubr.bf16.gmra.mrb[0].mxu0 %v583
        %v643 = vpop.f32.mrb[0].mxu0
        %v644 = vadd.f32 0.0, %v643
        %v645 = vpop.f32.mrb[0].mxu0
        %v646 = vpop.f32.mrb[0].mxu0
        %v647 = vadd.f32 0.0, %v646
        %v648 = vpop.f32.mrb[0].mxu0
        %649 = vdwg.mxu0
        %v650 = vadd.f32 %v489, %v620
        %v651 = vadd.f32 %v493, %v623
        %v652 = vadd.f32 %v499, %v628
        %v653 = vadd.f32 %v503, %v631
        %v654 = vadd.f32 %v509, %v636
        %v655 = vadd.f32 %v513, %v639
        %v656 = vadd.f32 %v519, %v644
        %v657 = vadd.f32 %v523, %v647
        %v658 = vadd.f32 %v650, %v651
        %v659 = vadd.f32 %v658, %v652
        %v660 = vadd.f32 %v659, %v653
        %v661 = vadd.f32 %v660, %v654
        %v662 = vadd.f32 %v661, %v655
        %v663 = vadd.f32 %v662, %v656
        %v664 = vadd.f32 %v663, %v657
        %v665 = vrot.slane %v664, 4
        %v666 = vadd.f32 %v664, %v665
        %v667 = vrot.slane %v666, 2
        %v668 = vadd.f32 %v666, %v667
        %v669 = vrot.slane %v668, 1
        %v670 = vadd.f32 %v668, %v669
        %v671 = vrcp.pop 64.0
        %v672 = vmul.f32 %v670, %v671
        %v673 = vsub.f32 %v650, %v672
        %v674 = vsub.f32 %v651, %v672
        %v675 = vsub.f32 %v652, %v672
        %v676 = vsub.f32 %v653, %v672
        %v677 = vsub.f32 %v654, %v672
        %v678 = vsub.f32 %v655, %v672
        %v679 = vsub.f32 %v656, %v672
        %v680 = vsub.f32 %v657, %v672
        %v681 = vmul.f32 %v673, %v673
        %v682 = vmul.f32 %v674, %v674
        %v683 = vmul.f32 %v675, %v675
        %v684 = vmul.f32 %v676, %v676
        %v685 = vmul.f32 %v677, %v677
        %v686 = vmul.f32 %v678, %v678
        %v687 = vmul.f32 %v679, %v679
        %v688 = vmul.f32 %v680, %v680
        %v689 = vadd.f32 %v681, %v682
        %v690 = vadd.f32 %v689, %v683
        %v691 = vadd.f32 %v690, %v684
        %v692 = vadd.f32 %v691, %v685
        %v693 = vadd.f32 %v692, %v686
        %v694 = vadd.f32 %v693, %v687
        %v695 = vadd.f32 %v694, %v688
        %v696 = vrot.slane %v695, 4
        %v697 = vadd.f32 %v695, %v696
        %v698 = vrot.slane %v697, 2
        %v699 = vadd.f32 %v697, %v698
        %v700 = vrot.slane %v699, 1
        %v701 = vadd.f32 %v699, %v700
        %v702 = vmul.f32 %v701, %v671
        %v703 = vadd.f32 %v702, 1e-05
        %v704 = vrsqrt.pop %v703
        %v705 = vmul.f32 %v527, %v704
        %v706 = vmul.f32 %v672, %v705
        %v708 = vrot.slane %v706, 7
        %v710 = vsub.f32 %v527, %v708
        %v711 = vlaneseq
        %v712 = vshrl.u32 %v711, 7
        %v713 = vsub.s32 1, %v712
        %v714 = vrot.slane %v705, %v713
        %v715 = vmul.f32 %v650, %v714
        %v716 = vmul.f32 %v651, %v714
        %v717 = vmul.f32 %v652, %v714
        %v718 = vmul.f32 %v653, %v714
        %v719 = vmul.f32 %v654, %v714
        %v720 = vmul.f32 %v655, %v714
        %v721 = vmul.f32 %v656, %v714
        %v722 = vmul.f32 %v657, %v714
        %v723 = vlaneseq
        %v724 = vshrl.u32 %v723, 7
        %v725 = vsub.s32 2, %v724
        %v726 = vrot.slane %v710, %v725
        %v727 = vadd.f32 %v715, %v726
        %v728 = vadd.f32 %v716, %v726
        %v729 = vadd.f32 %v717, %v726
        %v730 = vadd.f32 %v718, %v726
        %v731 = vadd.f32 %v719, %v726
        %v732 = vadd.f32 %v720, %v726
        %v733 = vadd.f32 %v721, %v726
        %v734 = vadd.f32 %v722, %v726
        %p735 = scmp.lt.s32.totalorder %s19, 2
        // Predicated region
        $region69: #{tpu_custom_call.1} parent=39 // pred_check
          %p736 = pneg %p735
        $region70: #{tpu_custom_call.1} parent=39 // pred_check_branch
          %738 = sbr.rel (%p736) target = $region72
        $region71: #{tpu_custom_call.1} parent=39 // pred_region
          %v739 = vmax.f32 %v727, 0.0
          %v740 = vmax.f32 %v728, 0.0
          %v741 = vmax.f32 %v729, 0.0
          %v742 = vmax.f32 %v730, 0.0
          %v743 = vmax.f32 %v731, 0.0
          %v744 = vmax.f32 %v732, 0.0
          %v745 = vmax.f32 %v733, 0.0
          %v746 = vmax.f32 %v734, 0.0
          %v747 = vpack.c.bf16 %v740, %v739
          %v748 = vpack.c.bf16 %v742, %v741
          %v749 = vpack.c.bf16 %v744, %v743
          %v750 = vpack.c.bf16 %v746, %v745
          %751 = vst [vmem:[#allocation2] sm:$0xff] %v747
          %752 = vst [vmem:[#allocation2 + $0x8] sm:$0xff] %v748
          %753 = vst [vmem:[#allocation2 + $0x10] sm:$0xff] %v749
          %754 = vst [vmem:[#allocation2 + $0x18] sm:$0xff] %v750
        $region72: #{tpu_custom_call.1} parent=39 // pred_fallthru
          _
        %p755 = scmp.eq.s32.totalorder %s19, 2
        // Predicated region
        $region73: #{tpu_custom_call.1} parent=39 // pred_check
          %p756 = pneg %p755
        $region74: #{tpu_custom_call.1} parent=39 // pred_check_branch
          %758 = sbr.rel (%p756) target = $region76
        $region75: #{tpu_custom_call.1} parent=39 // pred_region
          %v759 = vld [vmem:[#allocation10] sm:$0xff]
          %v760 = vld [vmem:[#allocation10 + $0x8] sm:$0xff]
          %v761 = vld [vmem:[#allocation10 + $0x10] sm:$0xff]
          %v762 = vld [vmem:[#allocation10 + $0x18] sm:$0xff]
          %v763 = vld [vmem:[#allocation10 + $0x20] sm:$0xff]
          %v764 = vld [vmem:[#allocation10 + $0x28] sm:$0xff]
          %v765 = vld [vmem:[#allocation10 + $0x30] sm:$0xff]
          %v766 = vld [vmem:[#allocation10 + $0x38] sm:$0xff]
          %v767 = vadd.f32 %v727, %v759
          %v768 = vadd.f32 %v728, %v760
          %v769 = vadd.f32 %v729, %v761
          %v770 = vadd.f32 %v730, %v762
          %v771 = vadd.f32 %v731, %v763
          %v772 = vadd.f32 %v732, %v764
          %v773 = vadd.f32 %v733, %v765
          %v774 = vadd.f32 %v734, %v766
          %v775 = vmax.f32 %v767, 0.0
          %v776 = vmax.f32 %v768, 0.0
          %v777 = vmax.f32 %v769, 0.0
          %v778 = vmax.f32 %v770, 0.0
          %v779 = vmax.f32 %v771, 0.0
          %v780 = vmax.f32 %v772, 0.0
          %v781 = vmax.f32 %v773, 0.0
          %v782 = vmax.f32 %v774, 0.0
          %783 = vst [vmem:[#allocation11] sm:$0xff] %v775
          %784 = vst [vmem:[#allocation11 + $0x8] sm:$0xff] %v776
          %785 = vst [vmem:[#allocation11 + $0x10] sm:$0xff] %v777
          %786 = vst [vmem:[#allocation11 + $0x18] sm:$0xff] %v778
          %787 = vst [vmem:[#allocation11 + $0x20] sm:$0xff] %v779
          %788 = vst [vmem:[#allocation11 + $0x28] sm:$0xff] %v780
          %789 = vst [vmem:[#allocation11 + $0x30] sm:$0xff] %v781
          %790 = vst [vmem:[#allocation11 + $0x38] sm:$0xff] %v782
        $region76: #{tpu_custom_call.1} parent=39 // pred_fallthru
          _
        // Predicated region
        $region77: #{tpu_custom_call.1} parent=39 // pred_check
          %p791 = pneg %p147
        $region78: #{tpu_custom_call.1} parent=39 // pred_check_branch
          %793 = sbr.rel (%p791) target = $region80
        $region79: #{tpu_custom_call.1} parent=39 // pred_region
          %s795 = ssub.s32 1024, 1024
          %796 = vsyncadd [#allocation5], %s795
          %s797 = sshll.u32 [#allocation11], 4
          %s798 = int_to_ptr.vmem [resolvable:$true] %s797
          %803 = dma.vmem_to_hbm [thread:$0]  %s798, 1024, %s5, [#allocation5], 128, 128, 8
        $region80: #{tpu_custom_call.1} parent=39 // pred_fallthru
          _
        // Predicated region
        $region81: #{tpu_custom_call.1} parent=39 // pred_check
          %p804 = pneg %p147
        $region82: #{tpu_custom_call.1} parent=39 // pred_check_branch
          %806 = sbr.rel (%p804) target = $region84
        $region83: #{tpu_custom_call.1} parent=39 // pred_region
          %807 = dma.done [#allocation5], 1024
        $region84: #{tpu_custom_call.1} parent=39 // pred_fallthru
          _
      $region40: #{tpu_custom_call.1} parent=5 // pred_fallthru
        _
      %p808 = scmp.le.s32.totalorder 2, %s14
      // Predicated region
      $region85: #{tpu_custom_call.1} parent=5 // pred_check
        %p809 = pneg %p808
      $region86: #{tpu_custom_call.1} parent=5 // pred_check_branch
        %811 = sbr.rel (%p809) target = $region88
      $region87: #{tpu_custom_call.1} parent=5 // pred_region
        %s812 = ssub.s32 %s14, 2
      $region88: #{tpu_custom_call.1} parent=5 // pred_fallthru
        _
    $region6: #{tpu_custom_call.1} parent=1 // loop_footer
      %s18 = sadd.s32 1, %s14
    $region7: #{tpu_custom_call.1} parent=1 // loop_footer_branch
      %13 = sbr.rel target = $region3
    $region8: #{tpu_custom_call.1} parent=1 // loop_exit
      _
    %813 = vsyncpa [#allocation4], 1
    %s814 = scalar_lea.sflag [#allocation4], 1
    %815 = vsyncpa %s814, 1
    %816 = vsyncpa [#allocation7], 1
    %817 = vsyncpa [#allocation5], 1
    %s818 = scalar_lea.sflag [#allocation5], 1
    %819 = vsyncpa %s818, 1

</llo_original>
